<compile_context>
chip_gen: v5e
topology: v5e:2x2
jax: 0.10.0
libtpu: 0.0.40
codegen_flags: <defaults>
</compile_context>

<pallas_src>
import functools

import jax
import jax.numpy as jnp
from jax import lax
from jax.experimental import pallas as pl
from jax.experimental.pallas import tpu as pltpu


def _round_up(x, m):
    return ((x + m - 1) // m) * m


def _custom_loss_kernel(preds_ref, targets_ref, mask_ref, out_ref,
                        acc_ref, sr_col_ref, sr_row_ref, r2_row_ref, rr_ref, *,
                        quantiles, median_idx, decor_weight, n_obs):
    # preds_ref   : [tb, S, Q*H]  (native layout, quantile-flattened lanes)
    # targets_ref : [tb, S, H]
    # mask_ref    : [tb, S, 1]
    # out_ref     : [1, 1]  (SMEM)
    # acc_ref     : SMEM (2,) f32    -> [pinball_sum, mask_sum]
    # sr_col_ref  : VMEM (S, 1) f32  -> sum_{b,h} r
    # sr_row_ref  : VMEM (1, S) f32  -> sum_{b,h} r   (row orientation)
    # r2_row_ref  : VMEM (1, S) f32  -> sum_{b,h} r^2
    # rr_ref      : VMEM (S, S) f32  -> sum_{b,h} r r^T
    i = pl.program_id(0)
    nb = pl.num_programs(0)
    Q = len(quantiles)
    S = targets_ref.shape[1]
    H = targets_ref.shape[2]

    @pl.when(i == 0)
    def _init():
        acc_ref[0] = jnp.float32(0.0)
        acc_ref[1] = jnp.float32(0.0)
        sr_col_ref[...] = jnp.zeros_like(sr_col_ref)
        sr_row_ref[...] = jnp.zeros_like(sr_row_ref)
        r2_row_ref[...] = jnp.zeros_like(r2_row_ref)
        rr_ref[...] = jnp.zeros_like(rr_ref)

    p = preds_ref[...].astype(jnp.float32)       # [tb, S, Q*H]
    t = targets_ref[...].astype(jnp.float32)     # [tb, S, H]
    m = mask_ref[...].astype(jnp.float32)        # [tb, S, 1]

    # ---- pinball loss: accumulate over quantiles elementwise, ONE reduction --
    ql = jnp.zeros_like(t)                       # [tb, S, H]
    for qi in range(Q):                          # Q static & small -> unrolled
        q = jnp.float32(quantiles[qi])
        e = t - p[:, :, qi * H:(qi + 1) * H]
        ql = ql + jnp.maximum((q - 1.0) * e, q * e)
    acc_ref[0] = acc_ref[0] + jnp.sum(ql * m)    # mask broadcasts over H
    acc_ref[1] = acc_ref[1] + jnp.sum(m)

    # ---- residual decorrelation: streaming first/second moments -------------
    r = p[:, :, median_idx * H:(median_idx + 1) * H] - t       # [tb, S, H]

    r_colsum = jnp.sum(r, axis=2, keepdims=True)                # [tb, S, 1]
    sr_col_ref[...] = sr_col_ref[...] + jnp.sum(r_colsum, axis=0)          # [S,1]
    sr_row_ref[...] = sr_row_ref[...] + jnp.sum(jnp.sum(r, axis=2),
                                                axis=0, keepdims=True)     # [1,S]
    r2_row_ref[...] = r2_row_ref[...] + jnp.sum(jnp.sum(r * r, axis=2),
                                                axis=0, keepdims=True)     # [1,S]
    # one batched MXU matmul per tile (contract over H, batch over tb)
    rr = jnp.einsum('bsh,bth->bst', r, r, preferred_element_type=jnp.float32)
    rr_ref[...] = rr_ref[...] + jnp.sum(rr, axis=0)                        # [S,S]

    # ---- finalize ------------------------------------------------------------
    @pl.when(i == nb - 1)
    def _finalize():
        n = jnp.float32(n_obs)                   # N = B * H observations
        base_loss = acc_ref[0] / (acc_ref[1] * jnp.float32(Q * H))

        sr_col = sr_col_ref[...]                 # [S, 1]
        sr_row = sr_row_ref[...]                 # [1, S]
        outer = sr_col * sr_row                  # [S, S], pure broadcast multiply
        cov = (rr_ref[...] - outer / n) / (n - 1.0)                   # ddof=1
        dvar = (r2_row_ref[...] - sr_row * sr_row / n) / (n - 1.0)    # diag(cov)
        off_diag_sq = jnp.sum(cov * cov) - jnp.sum(dvar * dvar)
        penalty = off_diag_sq / jnp.float32(S * S)

        out_ref[0, 0] = base_loss + jnp.float32(decor_weight) * penalty


def custom_loss(preds, targets, mask=None, *, quantiles,
                delta=1.0, residual_decorrelation_weight=0.1,
                batch_tile=None):
    """preds: [B, S, Q, H], targets: [B, S, H], mask: [B, S] or None."""
    del delta  # unused in the PyTorch forward as well
    B, S, Q, H = preds.shape
    assert Q == len(quantiles)
    median_idx = len(quantiles) // 2

    if mask is None:
        # all-ones mask reproduces quantile_losses.mean(): sum / (B*S*Q*H)
        mask = jnp.ones((B, S), jnp.float32)
    mask3 = mask.astype(jnp.float32).reshape(B, S, 1)

    # free, contiguous reshape -- NO HBM transpose of preds
    preds_flat = preds.reshape(B, S, Q * H)

    # pick the largest batch tile (divisor of B) whose double-buffered input
    # blocks + scratch stay well inside the default scoped-VMEM window.
    if batch_tile is None:
        p_item = jnp.dtype(preds.dtype).itemsize
        t_item = jnp.dtype(targets.dtype).itemsize
        per_b = _round_up(S, 8) * (_round_up(Q * H, 128) * p_item
                                   + _round_up(H, 128) * t_item
                                   + 128 * 4)
        scratch = 4 * (3 * _round_up(S, 8) * 128
                       + _round_up(S, 8) * _round_up(S, 128))
        budget = 24 * 1024 * 1024 - scratch
        cap = max(1, budget // (2 * per_b))      # x2 for double buffering
        batch_tile = 1
        for tb_try in range(min(B, cap), 0, -1):
            if B % tb_try == 0:
                batch_tile = tb_try
                break
    tb = int(batch_tile)
    assert B % tb == 0, "batch_tile must divide B"
    nb = B // tb

    kernel = functools.partial(
        _custom_loss_kernel,
        quantiles=tuple(float(q) for q in quantiles),
        median_idx=median_idx,
        decor_weight=float(residual_decorrelation_weight),
        n_obs=B * H)

    out = pl.pallas_call(
        kernel,
        out_shape=jax.ShapeDtypeStruct((1, 1), jnp.float32),
        grid_spec=pltpu.PrefetchScalarGridSpec(
            num_scalar_prefetch=0,
            grid=(nb,),
            in_specs=[
                pl.BlockSpec((tb, S, Q * H), lambda i: (i, 0, 0)),
                pl.BlockSpec((tb, S, H), lambda i: (i, 0, 0)),
                pl.BlockSpec((tb, S, 1), lambda i: (i, 0, 0)),
            ],
            out_specs=pl.BlockSpec((1, 1), lambda i: (0, 0),
                                   memory_space=pltpu.MemorySpace.SMEM),
            scratch_shapes=[
                pltpu.SMEM((2,), jnp.float32),
                pltpu.VMEM((S, 1), jnp.float32),
                pltpu.VMEM((1, S), jnp.float32),
                pltpu.VMEM((1, S), jnp.float32),
                pltpu.VMEM((S, S), jnp.float32),
            ]),
        compiler_params=pltpu.CompilerParams(
            dimension_semantics=("arbitrary",),
            vmem_limit_bytes=32 * 1024 * 1024),
    )(preds_flat, targets, mask3)
    return out[0, 0]


def _reference_loss(preds, targets, mask, quantiles, weight):
    """Pure-JAX mirror of the PyTorch module (two-pass covariance)."""
    q = jnp.asarray(quantiles, jnp.float32).reshape(1, 1, -1, 1)
    mi = len(quantiles) // 2
    p = preds.astype(jnp.float32)
    t = targets.astype(jnp.float32)
    err = t[:, :, None, :] - p
    ql = jnp.maximum((q - 1.0) * err, q * err)
    if mask is None:
        base = ql.mean()
    else:
        m = mask.astype(jnp.float32)[:, :, None, None]
        base = (ql * m).sum() / (m.sum() * p.shape[2] * p.shape[3])
    res = p[:, :, mi, :] - t                                   # [B, S, H]
    B, S, H = res.shape
    x = jnp.transpose(res, (0, 2, 1)).reshape(-1, S)           # [B*H, S]
    xc = x - x.mean(axis=0, keepdims=True)
    cov = jnp.matmul(xc.T, xc, precision=lax.Precision.HIGHEST) / (x.shape[0] - 1)
    off = cov - jnp.diag(jnp.diag(cov))
    pen = jnp.mean(off ** 2)
    return base + weight * pen


if __name__ == "__main__":
    B, S, Q, H = 2, 8, 5, 32
    quantiles = [0.1, 0.25, 0.5, 0.75, 0.9]

    key = jax.random.PRNGKey(0)
    k1, k2 = jax.random.split(key)
    preds = jax.random.normal(k1, (B, S, Q, H), dtype=jnp.float32)
    targets = jax.random.normal(k2, (B, S, H), dtype=jnp.float32)
    mask = jnp.ones((B, S), jnp.float32).at[0, :3].set(0.0)

    # batch_tile=1 -> grid=(2,): exercises init / accumulate / finalize path.
    loss = custom_loss(preds, targets, quantiles=quantiles, delta=1.0,
                       residual_decorrelation_weight=0.1, batch_tile=1)
    loss_masked = custom_loss(preds, targets, mask, quantiles=quantiles,
                              delta=1.0, residual_decorrelation_weight=0.1,
                              batch_tile=1)
    jax.block_until_ready((loss, loss_masked))

    ref = _reference_loss(preds, targets, None, quantiles, 0.1)
    ref_masked = _reference_loss(preds, targets, mask, quantiles, 0.1)
    ok = bool(jnp.allclose(loss, ref, rtol=1e-2, atol=1e-3)) and \
         bool(jnp.allclose(loss_masked, ref_masked, rtol=1e-2, atol=1e-3))
    if not ok:
        raise SystemExit(
            f"MISMATCH kernel=({loss}, {loss_masked}) ref=({ref}, {ref_masked})")
    print("KERNEL_OK")
</pallas_src>

<mosaic_0001>
module attributes {stable_mosaic.version = 11 : i64} {
  func.func @_custom_loss_kernel(%arg0: i32, %arg1: memref<1x8x160xf32, #tpu.memory_space<vmem>>, %arg2: memref<1x8x32xf32, #tpu.memory_space<vmem>>, %arg3: memref<1x8x1xf32, #tpu.memory_space<vmem>>, %arg4: memref<1x1xf32, #tpu.memory_space<smem>>, %arg5: memref<2xf32, #tpu.memory_space<smem>>, %arg6: memref<8x1xf32, #tpu.memory_space<vmem>>, %arg7: memref<1x8xf32, #tpu.memory_space<vmem>>, %arg8: memref<1x8xf32, #tpu.memory_space<vmem>>, %arg9: memref<8x8xf32, #tpu.memory_space<vmem>>) attributes {dimension_semantics = [#tpu.dimension_semantics<arbitrary>], iteration_bounds = array<i64: 2>, scalar_prefetch = 0 : i64, scratch_operands = 5 : i64, tpu.core_type = #tpu.core_type<tc>, window_params = [{transform_indices = @transform_0, window_bounds = array<i64: 1, 8, 160>}, {transform_indices = @transform_1, window_bounds = array<i64: 1, 8, 32>}, {transform_indices = @transform_2, window_bounds = array<i64: 1, 8, 1>}, {transform_indices = @transform_3, window_bounds = array<i64: 1, 1>}]} {
    %c0_i32 = arith.constant 0 : i32
    %0 = arith.cmpi eq, %arg0, %c0_i32 : i32
    %1 = arith.extui %0 : i1 to i32
    %c0_i32_0 = arith.constant 0 : i32
    %2 = arith.cmpi ne, %1, %c0_i32_0 : i32
    scf.if %2 {
      %cst_54 = arith.constant 0.000000e+00 : f32
      %c0_55 = arith.constant 0 : index
      %97 = memref.load %arg5[%c0_55] : memref<2xf32, #tpu.memory_space<smem>>
      memref.store %cst_54, %arg5[%c0_55] : memref<2xf32, #tpu.memory_space<smem>>
      %cst_56 = arith.constant 0.000000e+00 : f32
      %c1_57 = arith.constant 1 : index
      %98 = memref.load %arg5[%c1_57] : memref<2xf32, #tpu.memory_space<smem>>
      memref.store %cst_56, %arg5[%c1_57] : memref<2xf32, #tpu.memory_space<smem>>
      %cst_58 = arith.constant 0.000000e+00 : f32
      %99 = vector.broadcast %cst_58 : f32 to vector<8x1xf32>
      %c0_59 = arith.constant 0 : index
      %c0_60 = arith.constant 0 : index
      %100 = vector.load %arg6[%c0_59, %c0_60] : memref<8x1xf32, #tpu.memory_space<vmem>>, vector<8x1xf32>
      tpu.vector_store %arg6[%c0_59, %c0_60], %99 {strides = array<i32>} : memref<8x1xf32, #tpu.memory_space<vmem>>, vector<8x1xf32>,
      %cst_61 = arith.constant 0.000000e+00 : f32
      %101 = vector.broadcast %cst_61 : f32 to vector<1x8xf32>
      %c0_62 = arith.constant 0 : index
      %c0_63 = arith.constant 0 : index
      %102 = vector.load %arg7[%c0_62, %c0_63] : memref<1x8xf32, #tpu.memory_space<vmem>>, vector<1x8xf32>
      tpu.vector_store %arg7[%c0_62, %c0_63], %101 {strides = array<i32>} : memref<1x8xf32, #tpu.memory_space<vmem>>, vector<1x8xf32>,
      %cst_64 = arith.constant 0.000000e+00 : f32
      %103 = vector.broadcast %cst_64 : f32 to vector<1x8xf32>
      %c0_65 = arith.constant 0 : index
      %c0_66 = arith.constant 0 : index
      %104 = vector.load %arg8[%c0_65, %c0_66] : memref<1x8xf32, #tpu.memory_space<vmem>>, vector<1x8xf32>
      tpu.vector_store %arg8[%c0_65, %c0_66], %103 {strides = array<i32>} : memref<1x8xf32, #tpu.memory_space<vmem>>, vector<1x8xf32>,
      %cst_67 = arith.constant 0.000000e+00 : f32
      %105 = vector.broadcast %cst_67 : f32 to vector<8x8xf32>
      %c0_68 = arith.constant 0 : index
      %c0_69 = arith.constant 0 : index
      %106 = vector.load %arg9[%c0_68, %c0_69] : memref<8x8xf32, #tpu.memory_space<vmem>>, vector<8x8xf32>
      tpu.vector_store %arg9[%c0_68, %c0_69], %105 {strides = array<i32>} : memref<8x8xf32, #tpu.memory_space<vmem>>, vector<8x8xf32>,
    } else {
    }
    %c0 = arith.constant 0 : index
    %c0_1 = arith.constant 0 : index
    %c0_2 = arith.constant 0 : index
    %3 = vector.load %arg1[%c0, %c0_1, %c0_2] : memref<1x8x160xf32, #tpu.memory_space<vmem>>, vector<1x8x160xf32>
    %c0_3 = arith.constant 0 : index
    %c0_4 = arith.constant 0 : index
    %c0_5 = arith.constant 0 : index
    %4 = vector.load %arg2[%c0_3, %c0_4, %c0_5] : memref<1x8x32xf32, #tpu.memory_space<vmem>>, vector<1x8x32xf32>
    %c0_6 = arith.constant 0 : index
    %c0_7 = arith.constant 0 : index
    %c0_8 = arith.constant 0 : index
    %5 = vector.load %arg3[%c0_6, %c0_7, %c0_8] : memref<1x8x1xf32, #tpu.memory_space<vmem>>, vector<1x8x1xf32>
    %cst = arith.constant 0.000000e+00 : f32
    %6 = vector.broadcast %cst : f32 to vector<1x8x32xf32>
    %7 = vector.extract_strided_slice %3 {offsets = [0, 0, 0], sizes = [1, 8, 32], strides = [1, 1, 1]} : vector<1x8x160xf32> to vector<1x8x32xf32>
    %8 = arith.subf %4, %7 : vector<1x8x32xf32>
    %cst_9 = arith.constant 1.000000e-01 : f32
    %cst_10 = arith.constant 1.000000e+00 : f32
    %9 = arith.subf %cst_9, %cst_10 : f32
    %10 = vector.broadcast %9 : f32 to vector<1x8x32xf32>
    %11 = arith.mulf %10, %8 : vector<1x8x32xf32>
    %cst_11 = arith.constant 1.000000e-01 : f32
    %12 = vector.broadcast %cst_11 : f32 to vector<1x8x32xf32>
    %13 = arith.mulf %12, %8 : vector<1x8x32xf32>
    %14 = arith.maximumf %11, %13 : vector<1x8x32xf32>
    %15 = arith.addf %6, %14 : vector<1x8x32xf32>
    %16 = vector.extract_strided_slice %3 {offsets = [0, 0, 32], sizes = [1, 8, 32], strides = [1, 1, 1]} : vector<1x8x160xf32> to vector<1x8x32xf32>
    %17 = arith.subf %4, %16 : vector<1x8x32xf32>
    %cst_12 = arith.constant 2.500000e-01 : f32
    %cst_13 = arith.constant 1.000000e+00 : f32
    %18 = arith.subf %cst_12, %cst_13 : f32
    %19 = vector.broadcast %18 : f32 to vector<1x8x32xf32>
    %20 = arith.mulf %19, %17 : vector<1x8x32xf32>
    %cst_14 = arith.constant 2.500000e-01 : f32
    %21 = vector.broadcast %cst_14 : f32 to vector<1x8x32xf32>
    %22 = arith.mulf %21, %17 : vector<1x8x32xf32>
    %23 = arith.maximumf %20, %22 : vector<1x8x32xf32>
    %24 = arith.addf %15, %23 : vector<1x8x32xf32>
    %25 = vector.extract_strided_slice %3 {offsets = [0, 0, 64], sizes = [1, 8, 32], strides = [1, 1, 1]} : vector<1x8x160xf32> to vector<1x8x32xf32>
    %26 = arith.subf %4, %25 : vector<1x8x32xf32>
    %cst_15 = arith.constant 5.000000e-01 : f32
    %cst_16 = arith.constant 1.000000e+00 : f32
    %27 = arith.subf %cst_15, %cst_16 : f32
    %28 = vector.broadcast %27 : f32 to vector<1x8x32xf32>
    %29 = arith.mulf %28, %26 : vector<1x8x32xf32>
    %cst_17 = arith.constant 5.000000e-01 : f32
    %30 = vector.broadcast %cst_17 : f32 to vector<1x8x32xf32>
    %31 = arith.mulf %30, %26 : vector<1x8x32xf32>
    %32 = arith.maximumf %29, %31 : vector<1x8x32xf32>
    %33 = arith.addf %24, %32 : vector<1x8x32xf32>
    %34 = vector.extract_strided_slice %3 {offsets = [0, 0, 96], sizes = [1, 8, 32], strides = [1, 1, 1]} : vector<1x8x160xf32> to vector<1x8x32xf32>
    %35 = arith.subf %4, %34 : vector<1x8x32xf32>
    %cst_18 = arith.constant 7.500000e-01 : f32
    %cst_19 = arith.constant 1.000000e+00 : f32
    %36 = arith.subf %cst_18, %cst_19 : f32
    %37 = vector.broadcast %36 : f32 to vector<1x8x32xf32>
    %38 = arith.mulf %37, %35 : vector<1x8x32xf32>
    %cst_20 = arith.constant 7.500000e-01 : f32
    %39 = vector.broadcast %cst_20 : f32 to vector<1x8x32xf32>
    %40 = arith.mulf %39, %35 : vector<1x8x32xf32>
    %41 = arith.maximumf %38, %40 : vector<1x8x32xf32>
    %42 = arith.addf %33, %41 : vector<1x8x32xf32>
    %43 = vector.extract_strided_slice %3 {offsets = [0, 0, 128], sizes = [1, 8, 32], strides = [1, 1, 1]} : vector<1x8x160xf32> to vector<1x8x32xf32>
    %44 = arith.subf %4, %43 : vector<1x8x32xf32>
    %cst_21 = arith.constant 0.899999976 : f32
    %cst_22 = arith.constant 1.000000e+00 : f32
    %45 = arith.subf %cst_21, %cst_22 : f32
    %46 = vector.broadcast %45 : f32 to vector<1x8x32xf32>
    %47 = arith.mulf %46, %44 : vector<1x8x32xf32>
    %cst_23 = arith.constant 0.899999976 : f32
    %48 = vector.broadcast %cst_23 : f32 to vector<1x8x32xf32>
    %49 = arith.mulf %48, %44 : vector<1x8x32xf32>
    %50 = arith.maximumf %47, %49 : vector<1x8x32xf32>
    %51 = arith.addf %42, %50 : vector<1x8x32xf32>
    %c0_24 = arith.constant 0 : index
    %52 = memref.load %arg5[%c0_24] : memref<2xf32, #tpu.memory_space<smem>>
    %53 = vector.broadcast %5 : vector<1x8x1xf32> to vector<1x8x32xf32>
    %54 = arith.mulf %51, %53 : vector<1x8x32xf32>
    %55 = vector.shape_cast %54 : vector<1x8x32xf32> to vector<1x1x8x32xf32>
    %cst_25 = arith.constant dense<0.000000e+00> : vector<1xf32>
    %56 = vector.multi_reduction <add>, %55, %cst_25 [1, 2, 3] : vector<1x1x8x32xf32> to vector<1xf32>
    %57 = vector.shape_cast %56 : vector<1xf32> to vector<1x1x1x1xf32>
    %58 = vector.extract %57[0, 0, 0, 0] : f32 from vector<1x1x1x1xf32>
    %59 = arith.addf %52, %58 : f32
    %c0_26 = arith.constant 0 : index
    %60 = memref.load %arg5[%c0_26] : memref<2xf32, #tpu.memory_space<smem>>
    memref.store %59, %arg5[%c0_26] : memref<2xf32, #tpu.memory_space<smem>>
    %c1 = arith.constant 1 : index
    %61 = memref.load %arg5[%c1] : memref<2xf32, #tpu.memory_space<smem>>
    %62 = vector.shape_cast %5 : vector<1x8x1xf32> to vector<1x1x8x1xf32>
    %cst_27 = arith.constant dense<0.000000e+00> : vector<1xf32>
    %63 = vector.multi_reduction <add>, %62, %cst_27 [1, 2, 3] : vector<1x1x8x1xf32> to vector<1xf32>
    %64 = vector.shape_cast %63 : vector<1xf32> to vector<1x1x1x1xf32>
    %65 = vector.extract %64[0, 0, 0, 0] : f32 from vector<1x1x1x1xf32>
    %66 = arith.addf %61, %65 : f32
    %c1_28 = arith.constant 1 : index
    %67 = memref.load %arg5[%c1_28] : memref<2xf32, #tpu.memory_space<smem>>
    memref.store %66, %arg5[%c1_28] : memref<2xf32, #tpu.memory_space<smem>>
    %68 = vector.extract_strided_slice %3 {offsets = [0, 0, 64], sizes = [1, 8, 32], strides = [1, 1, 1]} : vector<1x8x160xf32> to vector<1x8x32xf32>
    %69 = arith.subf %68, %4 : vector<1x8x32xf32>
    %cst_29 = arith.constant dense<0.000000e+00> : vector<1x8xf32>
    %70 = vector.multi_reduction <add>, %69, %cst_29 [2] : vector<1x8x32xf32> to vector<1x8xf32>
    %71 = vector.shape_cast %70 : vector<1x8xf32> to vector<1x8x1xf32>
    %c0_30 = arith.constant 0 : index
    %c0_31 = arith.constant 0 : index
    %72 = vector.load %arg6[%c0_30, %c0_31] : memref<8x1xf32, #tpu.memory_space<vmem>>, vector<8x1xf32>
    %cst_32 = arith.constant dense<0.000000e+00> : vector<8x1xf32>
    %73 = vector.multi_reduction <add>, %71, %cst_32 [0] : vector<1x8x1xf32> to vector<8x1xf32>
    %74 = arith.addf %72, %73 : vector<8x1xf32>
    %c0_33 = arith.constant 0 : index
    %c0_34 = arith.constant 0 : index
    %75 = vector.load %arg6[%c0_33, %c0_34] : memref<8x1xf32, #tpu.memory_space<vmem>>, vector<8x1xf32>
    tpu.vector_store %arg6[%c0_33, %c0_34], %74 {strides = array<i32>} : memref<8x1xf32, #tpu.memory_space<vmem>>, vector<8x1xf32>,
    %c0_35 = arith.constant 0 : index
    %c0_36 = arith.constant 0 : index
    %76 = vector.load %arg7[%c0_35, %c0_36] : memref<1x8xf32, #tpu.memory_space<vmem>>, vector<1x8xf32>
    %cst_37 = arith.constant dense<0.000000e+00> : vector<1x8xf32>
    %77 = vector.multi_reduction <add>, %69, %cst_37 [2] : vector<1x8x32xf32> to vector<1x8xf32>
    %cst_38 = arith.constant dense<0.000000e+00> : vector<8xf32>
    %78 = vector.multi_reduction <add>, %77, %cst_38 [0] : vector<1x8xf32> to vector<8xf32>
    %79 = vector.shape_cast %78 : vector<8xf32> to vector<1x8xf32>
    %80 = arith.addf %76, %79 : vector<1x8xf32>
    %c0_39 = arith.constant 0 : index
    %c0_40 = arith.constant 0 : index
    %81 = vector.load %arg7[%c0_39, %c0_40] : memref<1x8xf32, #tpu.memory_space<vmem>>, vector<1x8xf32>
    tpu.vector_store %arg7[%c0_39, %c0_40], %80 {strides = array<i32>} : memref<1x8xf32, #tpu.memory_space<vmem>>, vector<1x8xf32>,
    %c0_41 = arith.constant 0 : index
    %c0_42 = arith.constant 0 : index
    %82 = vector.load %arg8[%c0_41, %c0_42] : memref<1x8xf32, #tpu.memory_space<vmem>>, vector<1x8xf32>
    %83 = arith.mulf %69, %69 : vector<1x8x32xf32>
    %cst_43 = arith.constant dense<0.000000e+00> : vector<1x8xf32>
    %84 = vector.multi_reduction <add>, %83, %cst_43 [2] : vector<1x8x32xf32> to vector<1x8xf32>
    %cst_44 = arith.constant dense<0.000000e+00> : vector<8xf32>
    %85 = vector.multi_reduction <add>, %84, %cst_44 [0] : vector<1x8xf32> to vector<8xf32>
    %86 = vector.shape_cast %85 : vector<8xf32> to vector<1x8xf32>
    %87 = arith.addf %82, %86 : vector<1x8xf32>
    %c0_45 = arith.constant 0 : index
    %c0_46 = arith.constant 0 : index
    %88 = vector.load %arg8[%c0_45, %c0_46] : memref<1x8xf32, #tpu.memory_space<vmem>>, vector<1x8xf32>
    tpu.vector_store %arg8[%c0_45, %c0_46], %87 {strides = array<i32>} : memref<1x8xf32, #tpu.memory_space<vmem>>, vector<1x8xf32>,
    "tpu.trace_start"() <{level = 10 : i32, message = "bsh,bth->bst"}> : () -> ()
    %cst_47 = arith.constant dense<0.000000e+00> : vector<1x8x8xf32>
    %89 = tpu.matmul %69, %69, %cst_47 {dimension_numbers = #tpu.dot_dimension_numbers<[2], [2], [1], [1], [0, 0, 0, 1, 1, 1], [0], [0]>} : vector<1x8x32xf32>, vector<1x8x32xf32>, vector<1x8x8xf32> -> vector<1x8x8xf32>
    "tpu.trace_stop"() : () -> ()
    %c0_48 = arith.constant 0 : index
    %c0_49 = arith.constant 0 : index
    %90 = vector.load %arg9[%c0_48, %c0_49] : memref<8x8xf32, #tpu.memory_space<vmem>>, vector<8x8xf32>
    %cst_50 = arith.constant dense<0.000000e+00> : vector<8x8xf32>
    %91 = vector.multi_reduction <add>, %89, %cst_50 [0] : vector<1x8x8xf32> to vector<8x8xf32>
    %92 = arith.addf %90, %91 : vector<8x8xf32>
    %c0_51 = arith.constant 0 : index
    %c0_52 = arith.constant 0 : index
    %93 = vector.load %arg9[%c0_51, %c0_52] : memref<8x8xf32, #tpu.memory_space<vmem>>, vector<8x8xf32>
    tpu.vector_store %arg9[%c0_51, %c0_52], %92 {strides = array<i32>} : memref<8x8xf32, #tpu.memory_space<vmem>>, vector<8x8xf32>,
    %c1_i32 = arith.constant 1 : i32
    %94 = arith.cmpi eq, %arg0, %c1_i32 : i32
    %95 = arith.extui %94 : i1 to i32
    %c0_i32_53 = arith.constant 0 : i32
    %96 = arith.cmpi ne, %95, %c0_i32_53 : i32
    scf.if %96 {
      %c0_54 = arith.constant 0 : index
      %97 = memref.load %arg5[%c0_54] : memref<2xf32, #tpu.memory_space<smem>>
      %c1_55 = arith.constant 1 : index
      %98 = memref.load %arg5[%c1_55] : memref<2xf32, #tpu.memory_space<smem>>
      %cst_56 = arith.constant 1.600000e+02 : f32
      %99 = arith.mulf %98, %cst_56 : f32
      %100 = arith.divf %97, %99 : f32
      %c0_57 = arith.constant 0 : index
      %c0_58 = arith.constant 0 : index
      %101 = vector.load %arg6[%c0_57, %c0_58] : memref<8x1xf32, #tpu.memory_space<vmem>>, vector<8x1xf32>
      %c0_59 = arith.constant 0 : index
      %c0_60 = arith.constant 0 : index
      %102 = vector.load %arg7[%c0_59, %c0_60] : memref<1x8xf32, #tpu.memory_space<vmem>>, vector<1x8xf32>
      %103 = vector.broadcast %101 : vector<8x1xf32> to vector<8x8xf32>
      %104 = vector.broadcast %102 : vector<1x8xf32> to vector<8x8xf32>
      %105 = arith.mulf %103, %104 : vector<8x8xf32>
      %c0_61 = arith.constant 0 : index
      %c0_62 = arith.constant 0 : index
      %106 = vector.load %arg9[%c0_61, %c0_62] : memref<8x8xf32, #tpu.memory_space<vmem>>, vector<8x8xf32>
      %cst_63 = arith.constant 6.400000e+01 : f32
      %107 = vector.broadcast %cst_63 : f32 to vector<8x8xf32>
      %108 = arith.divf %105, %107 : vector<8x8xf32>
      %109 = arith.subf %106, %108 : vector<8x8xf32>
      %cst_64 = arith.constant 6.400000e+01 : f32
      %cst_65 = arith.constant 1.000000e+00 : f32
      %110 = arith.subf %cst_64, %cst_65 : f32
      %111 = vector.broadcast %110 : f32 to vector<8x8xf32>
      %112 = arith.divf %109, %111 : vector<8x8xf32>
      %c0_66 = arith.constant 0 : index
      %c0_67 = arith.constant 0 : index
      %113 = vector.load %arg8[%c0_66, %c0_67] : memref<1x8xf32, #tpu.memory_space<vmem>>, vector<1x8xf32>
      %114 = arith.mulf %102, %102 : vector<1x8xf32>
      %cst_68 = arith.constant 6.400000e+01 : f32
      %115 = vector.broadcast %cst_68 : f32 to vector<1x8xf32>
      %116 = arith.divf %114, %115 : vector<1x8xf32>
      %117 = arith.subf %113, %116 : vector<1x8xf32>
      %cst_69 = arith.constant 6.400000e+01 : f32
      %cst_70 = arith.constant 1.000000e+00 : f32
      %118 = arith.subf %cst_69, %cst_70 : f32
      %119 = vector.broadcast %118 : f32 to vector<1x8xf32>
      %120 = arith.divf %117, %119 : vector<1x8xf32>
      %121 = arith.mulf %112, %112 : vector<8x8xf32>
      %122 = vector.shape_cast %121 : vector<8x8xf32> to vector<1x8x8xf32>
      %cst_71 = arith.constant dense<0.000000e+00> : vector<1xf32>
      %123 = vector.multi_reduction <add>, %122, %cst_71 [1, 2] : vector<1x8x8xf32> to vector<1xf32>
      %124 = vector.shape_cast %123 : vector<1xf32> to vector<1x1x1xf32>
      %125 = vector.extract %124[0, 0, 0] : f32 from vector<1x1x1xf32>
      %126 = arith.mulf %120, %120 : vector<1x8xf32>
      %127 = vector.shape_cast %126 : vector<1x8xf32> to vector<1x1x8xf32>
      %cst_72 = arith.constant dense<0.000000e+00> : vector<1xf32>
      %128 = vector.multi_reduction <add>, %127, %cst_72 [1, 2] : vector<1x1x8xf32> to vector<1xf32>
      %129 = vector.shape_cast %128 : vector<1xf32> to vector<1x1x1xf32>
      %130 = vector.extract %129[0, 0, 0] : f32 from vector<1x1x1xf32>
      %131 = arith.subf %125, %130 : f32
      %cst_73 = arith.constant 6.400000e+01 : f32
      %132 = arith.divf %131, %cst_73 : f32
      %cst_74 = arith.constant 1.000000e-01 : f32
      %133 = arith.mulf %cst_74, %132 : f32
      %134 = arith.addf %100, %133 : f32
      %c0_75 = arith.constant 0 : index
      %c0_76 = arith.constant 0 : index
      %135 = memref.load %arg4[%c0_75, %c0_76] : memref<1x1xf32, #tpu.memory_space<smem>>
      memref.store %134, %arg4[%c0_75, %c0_76] : memref<1x1xf32, #tpu.memory_space<smem>>
    } else {
    }
    return
  }
  func.func @transform_0(%arg0: i32) -> (i32, i32, i32) {
    %c0_i32 = arith.constant 0 : i32
    %c0_i32_0 = arith.constant 0 : i32
    %c0_i32_1 = arith.constant 0 : i32
    return %arg0, %c0_i32, %c0_i32_0 : i32, i32, i32
  }
  func.func @transform_1(%arg0: i32) -> (i32, i32, i32) {
    %c0_i32 = arith.constant 0 : i32
    %c0_i32_0 = arith.constant 0 : i32
    %c0_i32_1 = arith.constant 0 : i32
    return %arg0, %c0_i32, %c0_i32_0 : i32, i32, i32
  }
  func.func @transform_2(%arg0: i32) -> (i32, i32, i32) {
    %c0_i32 = arith.constant 0 : i32
    %c0_i32_0 = arith.constant 0 : i32
    %c0_i32_1 = arith.constant 0 : i32
    return %arg0, %c0_i32, %c0_i32_0 : i32, i32, i32
  }
  func.func @transform_3(%arg0: i32) -> (i32, i32) {
    %c0_i32 = arith.constant 0 : i32
    %c0_i32_0 = arith.constant 0 : i32
    %c0_i32_1 = arith.constant 0 : i32
    return %c0_i32, %c0_i32_0 : i32, i32
  }
}

</mosaic_0001>

<llo_original>
// kernel: tpu_custom_call.1
$region0: #{tpu_custom_call.1}
  #allocation0 [shape = 'u32[]', space=smem, size = 0x4, offset = 0x4, fixed_abs, tag = 'smem constant byte address 0x4 - core index']
  #allocation1 [shape = 'u32[72,128]{1,0:T(1,128)}', space=vmem, size = 0x9000, scoped, tag = 'internal scratch']
  #allocation2 [shape = 'f32[2]{0:T(128)}', space=smem, size = 0x200, scoped, tag = 'scratch operand']
  #allocation3 [shape = 'f32[8,1]{1,0:T(8,128)}', space=vmem, size = 0x1000, scoped, tag = 'scratch operand']
  #allocation4 [shape = 'f32[1,8]{1,0:T(1,128)}', space=vmem, size = 0x200, scoped, tag = 'scratch operand']
  #allocation5 [shape = 'f32[1,8]{1,0:T(1,128)}', space=vmem, size = 0x200, scoped, tag = 'scratch operand']
  #allocation6 [shape = 'f32[8,8]{1,0:T(8,128)}', space=vmem, size = 0x1000, scoped, tag = 'scratch operand']
  %s0 = inlined_call_operand.hbm [shape: f32[2,8,160], index: 0, kind: input, shape index: {}]
  %s1 = inlined_call_operand.vmem [shape: f32[2,8,32], index: 1, kind: input, shape index: {}]
  %s2 = inlined_call_operand.vmem [shape: f32[2,8,1], index: 2, kind: input, shape index: {}]
  %s3 = inlined_call_operand.hbm [shape: f32[1,1], index: 3, kind: output, shape index: {}]
  %s4 = sld [smem:[#allocation0]]
  $region57: #{tpu_custom_call.1} parent=0
    _
  %s6 = ssub.s32 1, %s4
  %s7 = scalar_select 0, %s6, %s4
  $region1: #{tpu_custom_call.1} parent=0
    #allocation7 [shape = 'u8[16384]{0}', space=vmem, size = 0x4000, scoped, tag = 'input window, operand 0']
    #allocation8 [shape = 's32[2]{0}', space=sflag, size = 0x8, scoped, tag = 'scoped memory for tpu_custom_call.1']
    #allocation9 [shape = 's32[2]{0}', space=sflag, size = 0x8, scoped, tag = 'scoped memory for tpu_custom_call.1']
    #allocation10 [shape = 'u8[512]{0}', space=smem, size = 0x200, scoped, tag = 'output window, operand 0, single buffered']
    %8 = vsyncpa [#allocation8], 0
    %s9 = scalar_lea.sflag [#allocation8], 1
    %10 = vsyncpa %s9, 0
    %11 = vsyncpa [#allocation9], 0
    loop: start=0, step=1, limit=4
    $region2: #{tpu_custom_call.1} parent=1 // loop_pre_header
      _
    $region3: #{tpu_custom_call.1} parent=1 // loop_header
      %s13 = sphi 0, %s17
      %p14 = scmp.ge.s32.totalorder %s13, 4
      %s23 = sphi 0, %s25
      %s26 = sphi 0, %s23
      %s27 = sphi 0, %s26
      %s43 = sphi 0, %s27
      %s49 = sphi 0, %s51
      %s52 = sphi 0, %s49
      %s53 = sphi 0, %s52
      %s69 = sphi 0, %s53
      %s75 = sphi 0, %s77
      %s78 = sphi 0, %s75
      %s79 = sphi 0, %s78
      %s95 = sphi 0, %s79
      %s99 = sphi 0, %s99
      %s101 = sphi 0, %s99
      %s102 = sphi 0, %s101
      %s116 = sphi 0, %s102
    $region4: #{tpu_custom_call.1} parent=1 // loop_header_branch
      %16 = sbr.rel (%p14) target = $region8
    $region5: #{tpu_custom_call.1} parent=1 // loop_body
      %s18 = ssub.s32 %s13, 1
      %s19 = ssub.s32 %s13, 2
      %s20 = sadd.s32 %s13, 1
      %s21 = ssub.s32 %s13, %s20
      %p22 = scmp.eq.s32.totalorder %s21, 0
      %s24 = sadd.s32 %s23, 1
      %s25 = scalar_select %p22, %s23, %s24
      %p28 = pneg %p22
      %p29 = scmp.eq.s32.totalorder %s13, 1
      %p30 = por %p28, %p29
      %p31 = scmp.ne.s32.totalorder %s23, %s26
      %p32 = scmp.eq.s32.totalorder %s13, 0
      %p33 = por %p31, %p32
      %p34 = scmp.ne.s32.totalorder %s23, %s26
      %p35 = scmp.eq.s32.totalorder %s18, 1
      %p36 = por %p34, %p35
      %p37 = scmp.ne.s32.totalorder %s26, %s27
      %p38 = scmp.eq.s32.totalorder %s18, 0
      %p39 = por %p37, %p38
      %p40 = scmp.ne.s32.totalorder %s26, %s27
      %p41 = scmp.eq.s32.totalorder %s19, 1
      %p42 = por %p40, %p41
      %p44 = scmp.ne.s32.totalorder %s27, %s43
      %p45 = scmp.eq.s32.totalorder %s19, 0
      %p46 = por %p44, %p45
      %s47 = ssub.s32 %s13, %s20
      %p48 = scmp.eq.s32.totalorder %s47, 0
      %s50 = sadd.s32 %s49, 1
      %s51 = scalar_select %p48, %s49, %s50
      %p54 = pneg %p48
      %p55 = scmp.eq.s32.totalorder %s13, 1
      %p56 = por %p54, %p55
      %p57 = scmp.ne.s32.totalorder %s49, %s52
      %p58 = scmp.eq.s32.totalorder %s13, 0
      %p59 = por %p57, %p58
      %p60 = scmp.ne.s32.totalorder %s49, %s52
      %p61 = scmp.eq.s32.totalorder %s18, 1
      %p62 = por %p60, %p61
      %p63 = scmp.ne.s32.totalorder %s52, %s53
      %p64 = scmp.eq.s32.totalorder %s18, 0
      %p65 = por %p63, %p64
      %p66 = scmp.ne.s32.totalorder %s52, %s53
      %p67 = scmp.eq.s32.totalorder %s19, 1
      %p68 = por %p66, %p67
      %p70 = scmp.ne.s32.totalorder %s53, %s69
      %p71 = scmp.eq.s32.totalorder %s19, 0
      %p72 = por %p70, %p71
      %s73 = ssub.s32 %s13, %s20
      %p74 = scmp.eq.s32.totalorder %s73, 0
      %s76 = sadd.s32 %s75, 1
      %s77 = scalar_select %p74, %s75, %s76
      %p80 = pneg %p74
      %p81 = scmp.eq.s32.totalorder %s13, 1
      %p82 = por %p80, %p81
      %p83 = scmp.ne.s32.totalorder %s75, %s78
      %p84 = scmp.eq.s32.totalorder %s13, 0
      %p85 = por %p83, %p84
      %p86 = scmp.ne.s32.totalorder %s75, %s78
      %p87 = scmp.eq.s32.totalorder %s18, 1
      %p88 = por %p86, %p87
      %p89 = scmp.ne.s32.totalorder %s78, %s79
      %p90 = scmp.eq.s32.totalorder %s18, 0
      %p91 = por %p89, %p90
      %p92 = scmp.ne.s32.totalorder %s78, %s79
      %p93 = scmp.eq.s32.totalorder %s19, 1
      %p94 = por %p92, %p93
      %p96 = scmp.ne.s32.totalorder %s79, %s95
      %p97 = scmp.eq.s32.totalorder %s19, 0
      %p98 = por %p96, %p97
      %s100 = sadd.s32 %s99, 1
      %p103 = scmp.eq.s32.totalorder %s13, 1
      %p104 = scmp.ne.s32.totalorder %s99, %s101
      %p105 = scmp.eq.s32.totalorder %s13, 0
      %p106 = por %p104, %p105
      %p107 = scmp.ne.s32.totalorder %s99, %s101
      %p108 = scmp.eq.s32.totalorder %s18, 1
      %p109 = por %p107, %p108
      %p110 = scmp.ne.s32.totalorder %s101, %s102
      %p111 = scmp.eq.s32.totalorder %s18, 0
      %p112 = por %p110, %p111
      %p113 = scmp.ne.s32.totalorder %s101, %s102
      %p114 = scmp.eq.s32.totalorder %s19, 1
      %p115 = por %p113, %p114
      %p117 = scmp.ne.s32.totalorder %s102, %s116
      %p118 = scmp.eq.s32.totalorder %s19, 0
      %p119 = por %p117, %p118
      %p120 = scmp.le.s32.totalorder 1, %s13
      %p121 = scmp.lt.s32.totalorder %s13, 3
      %p122 = pnand %p120, %p121
      %p123 = pneg %p122
      // Predicated region
      $region9: #{tpu_custom_call.1} parent=5 // pred_check
        _
      $region10: #{tpu_custom_call.1} parent=5 // pred_check_branch
        %125 = sbr.rel (%p122) target = $region12
      $region11: #{tpu_custom_call.1} parent=5 // pred_region
        %s126 = ssub.s32 %s13, 1
      $region12: #{tpu_custom_call.1} parent=5 // pred_fallthru
        _
      %p127 = scmp.lt.s32.totalorder %s13, 2
      // Predicated region
      $region13: #{tpu_custom_call.1} parent=5 // pred_check
        %p128 = pneg %p127
      $region14: #{tpu_custom_call.1} parent=5 // pred_check_branch
        %130 = sbr.rel (%p128) target = $region16
      $region15: #{tpu_custom_call.1} parent=5 // pred_region
        // Predicated region
        $region17: #{tpu_custom_call.1} parent=15 // pred_check
          %p131 = pneg %p33
        $region18: #{tpu_custom_call.1} parent=15 // pred_check_branch
          %133 = sbr.rel (%p131) target = $region20
        $region19: #{tpu_custom_call.1} parent=15 // pred_region
          %s134 = sand.u32 %s23, 1
          %s135 = scalar_lea.sflag [#allocation8], %s134
          %s136 = sand.u32 %s23, 1
          %s137 = smul.addr %s136, 16
          %s138 = scalar_lea.vmem [#allocation7], %s137
          %140 = vsyncadd %s135, 0
          %s141 = smul.addr %s13, 2
          %s142 = smul.addr %s141, 8
          %s143 = scalar_lea.hbm %s0, %s142
          %s145 = sshll.u32 %s143, 4
          %s146 = int_to_ptr.hbm [resolvable:$true] %s145
          %s147 = sshll.u32 %s138, 4
          %s148 = int_to_ptr.vmem [resolvable:$true] %s147
          %150 = dma.hbm_to_vmem [thread:$0]  %s146, 256, %s148, %s135
        $region20: #{tpu_custom_call.1} parent=15 // pred_fallthru
          _
        // Predicated region
        $region21: #{tpu_custom_call.1} parent=15 // pred_check
          %p151 = pneg %p59
        $region22: #{tpu_custom_call.1} parent=15 // pred_check_branch
          %153 = sbr.rel (%p151) target = $region24
        $region23: #{tpu_custom_call.1} parent=15 // pred_region
          %p154 = scmp.lt.s32.totalorder %s13, 1
          %s155 = scalar_select %p154, %s13, 1
          %s156 = smul.addr %s155, 8
          %s157 = scalar_lea.vmem %s1, %s156
        $region24: #{tpu_custom_call.1} parent=15 // pred_fallthru
          _
        // Predicated region
        $region25: #{tpu_custom_call.1} parent=15 // pred_check
          %p158 = pneg %p85
        $region26: #{tpu_custom_call.1} parent=15 // pred_check_branch
          %160 = sbr.rel (%p158) target = $region28
        $region27: #{tpu_custom_call.1} parent=15 // pred_region
          %p161 = scmp.lt.s32.totalorder %s13, 1
          %s162 = scalar_select %p161, %s13, 1
          %s163 = smul.addr %s162, 8
          %s164 = scalar_lea.vmem %s2, %s163
        $region28: #{tpu_custom_call.1} parent=15 // pred_fallthru
          _
      $region16: #{tpu_custom_call.1} parent=5 // pred_fallthru
        _
      %p165 = scmp.le.s32.totalorder 1, %s13
      %p166 = scmp.lt.s32.totalorder %s13, 3
      %p167 = pnand %p165, %p166
      %p168 = pneg %p167
      // Predicated region
      $region29: #{tpu_custom_call.1} parent=5 // pred_check
        _
      $region30: #{tpu_custom_call.1} parent=5 // pred_check_branch
        %170 = sbr.rel (%p167) target = $region32
      $region31: #{tpu_custom_call.1} parent=5 // pred_region
        %s171 = ssub.s32 %s13, 1
        %s172 = sand.u32 %s26, 1
        %s173 = scalar_lea.sflag [#allocation8], %s172
        %s174 = sand.u32 %s26, 1
        %s175 = smul.addr %s174, 16
        %s176 = scalar_lea.vmem [#allocation7], %s175
        // Predicated region
        $region33: #{tpu_custom_call.1} parent=31 // pred_check
          %p177 = pneg %p39
        $region34: #{tpu_custom_call.1} parent=31 // pred_check_branch
          %179 = sbr.rel (%p177) target = $region36
        $region35: #{tpu_custom_call.1} parent=31 // pred_region
          %181 = dma.done %s173, 256
        $region36: #{tpu_custom_call.1} parent=31 // pred_fallthru
          _
        %s182 = sand.u32 %s26, 1
        %s183 = scalar_lea.sflag [#allocation8], %s182
        %s184 = sand.u32 %s26, 1
        %s185 = smul.addr %s184, 16
        %s186 = scalar_lea.vmem [#allocation7], %s185
        %p187 = pneg %p39
        %p188 = pneg %p36
        %p189 = scmp.lt.s32.totalorder %s18, 1
        %s190 = scalar_select %p189, %s18, 1
        %s191 = smul.addr %s190, 8
        %s192 = scalar_lea.vmem %s1, %s191
        %p193 = pneg %p65
        %p194 = pneg %p62
        %p195 = scmp.lt.s32.totalorder %s18, 1
        %s196 = scalar_select %p195, %s18, 1
        %s197 = smul.addr %s196, 8
        %s198 = scalar_lea.vmem %s2, %s197
        %p199 = pneg %p91
        %p200 = pneg %p88
        %p201 = pneg %p112
        %p202 = pneg %p109
        %p203 = scmp.lt.s32.totalorder %s18, 1
        %s204 = scalar_select %p203, %s18, 1
        %s205 = smul.addr %s204, 8
        %s206 = scalar_lea.vmem %s1, %s205
        %p207 = scmp.lt.s32.totalorder %s18, 1
        %s208 = scalar_select %p207, %s18, 1
        %s209 = smul.addr %s208, 8
        %s210 = scalar_lea.vmem %s2, %s209
        %p211 = scmp.eq.s32.totalorder %s18, 0
        // Predicated region
        $region37: #{tpu_custom_call.1} parent=31 // pred_check
          %p212 = pneg %p211
        $region38: #{tpu_custom_call.1} parent=31 // pred_check_branch
          %214 = sbr.rel (%p212) target = $region40
        $region39: #{tpu_custom_call.1} parent=31 // pred_region
          %s215 = scalar_lea.smem [#allocation2], 0
          %216 = sst [smem:[%s215]] 0.0
          %s217 = scalar_lea.smem [#allocation2], 1
          %218 = sst [smem:[%s217]] 0.0
          %vm219 = vcmask 7168
          %220 = vst.msk [vmem:[#allocation3] sm:$0xff] %vm219, 0.0
          %vm221 = vcmask 57344
          %222 = vst.msk [vmem:[#allocation4] sm:$0x1] %vm221, 0.0
          %223 = vst.msk [vmem:[#allocation5] sm:$0x1] %vm221, 0.0
          %vm224 = vcmask 64512
          %225 = vst.msk [vmem:[#allocation6] sm:$0xff] %vm224, 0.0
        $region40: #{tpu_custom_call.1} parent=31 // pred_fallthru
          _
        %v226 = vld [vmem:[%s176] sm:$0xff]
        %v227 = vld [vmem:[%s176 + $0x8] sm:$0xff]
        %v228 = vld [vmem:[%s206] sm:$0xff]
        %v229 = vld [vmem:[%s210] sm:$0xff]
        %v230 = vsub.f32 %v228, %v226
        %v231 = vmul.f32 %v230, -0.9
        %v232 = vmul.f32 %v230, 0.1
        %v233 = vmax.f32 %v231, %v232
        %v234 = vadd.f32 %v233, 0.0
        %236 = vrot.lane.b32.xlu0 %v226, 96
        %v237 = vpop.permute.xlu0 %236
        %v239 = vsub.f32 %v228, %v237
        %v240 = vmul.f32 %v239, -0.75
        %v241 = vmul.f32 %v239, 0.25
        %v242 = vmax.f32 %v240, %v241
        %v243 = vadd.f32 %v234, %v242
        %244 = vrot.lane.b32.xlu0 %v226, 64
        %v245 = vpop.permute.xlu0 %244
        %v247 = vsub.f32 %v228, %v245
        %v248 = vmul.f32 %v247, -0.5
        %v249 = vmul.f32 %v247, 0.5
        %v250 = vmax.f32 %v248, %v249
        %v251 = vadd.f32 %v243, %v250
        %252 = vrot.lane.b32.xlu0 %v226, 32
        %v253 = vpop.permute.xlu0 %252
        %v255 = vsub.f32 %v228, %v253
        %v256 = vmul.f32 %v255, -0.25
        %v257 = vmul.f32 %v255, 0.75
        %v258 = vmax.f32 %v256, %v257
        %v259 = vadd.f32 %v251, %v258
        %v260 = vsub.f32 %v228, %v227
        %v261 = vmul.f32 %v260, -0.100000024
        %v262 = vmul.f32 %v260, 0.9
        %v263 = vmax.f32 %v261, %v262
        %v264 = vadd.f32 %v259, %v263
        %s265 = sld [smem:[#allocation2]]
        %267 = vset.pattern.permute.xlu0 0
        %268 = vperm.xlu0 %267, %v229
        %v269 = vpop.permute.xlu0 %268
        %v271 = vmul.f32 %v264, %v269
        %vm272 = vcmask 261120
        %v273 = vsel %vm272, %v271, 0.0
        %274 = vadd.xlane.f32.xlu0 %v273
        %v275 = vpop.xlane.xlu0 %274
        %v276 = vrot.slane %v275, 4
        %v277 = vadd.f32 %v275, %v276
        %v278 = vrot.slane %v277, 2
        %v279 = vadd.f32 %v277, %v278
        %v280 = vrot.slane %v279, 1
        %v281 = vadd.f32 %v279, %v280
        %s282 = vtos %v281
        %s283 = sadd.f32 %s265, %s282
        %s284 = scalar_lea.smem [#allocation2], 0
        %285 = sst [smem:[%s284]] %s283
        %s286 = sld [smem:[#allocation2 + $0x1]]
        %vm287 = vcmask 7168
        %v288 = vsel %vm287, %v229, 0.0
        %289 = vadd.xlane.f32.xlu0 %v288
        %v290 = vpop.xlane.xlu0 %289
        %v291 = vrot.slane %v290, 4
        %v292 = vadd.f32 %v290, %v291
        %v293 = vrot.slane %v292, 2
        %v294 = vadd.f32 %v292, %v293
        %v295 = vrot.slane %v294, 1
        %v296 = vadd.f32 %v294, %v295
        %s297 = vtos %v296
        %s298 = sadd.f32 %s286, %s297
        %s299 = scalar_lea.smem [#allocation2], 1
        %300 = sst [smem:[%s299]] %s298
        %302 = vrot.lane.b32.xlu0 %v228, 64
        %v303 = vpop.permute.xlu0 %302
        %v305 = vsub.f32 %v226, %v303
        %307 = vrot.lane.b32.xlu0 %v305, 64
        %v308 = vpop.permute.xlu0 %307
        %v310 = vsel %vm272, %v308, 0.0
        %311 = vadd.xlane.f32.xlu0 %v310
        %v312 = vpop.xlane.xlu0 %311
        %v313 = vld [vmem:[#allocation3] sm:$0xff]
        %v314 = vadd.f32 %v312, 0.0
        %v315 = vadd.f32 %v313, %v314
        %316 = vst.msk [vmem:[#allocation3] sm:$0xff] %vm287, %v315
        %v317 = vld [vmem:[#allocation4] sm:$0x1]
        %v319 = vperm.slane %v314, 0
        %v320 = vperm.slane %v314, 1
        %v321 = vperm.slane %v314, 2
        %v322 = vperm.slane %v314, 3
        %v323 = vperm.slane %v314, 4
        %v324 = vperm.slane %v314, 5
        %v325 = vperm.slane %v314, 6
        %v326 = vperm.slane %v314, 7
        %327 = vst [vmem:[#allocation1] ss:$9 sm:$0xff] %v319
        %s328 = scalar_lea.vmem [#allocation1], 1
        %329 = vst [vmem:[%s328] ss:$9 sm:$0xff] %v320
        %s330 = scalar_lea.vmem [#allocation1], 2
        %331 = vst [vmem:[%s330] ss:$9 sm:$0xff] %v321
        %s332 = scalar_lea.vmem [#allocation1], 3
        %333 = vst [vmem:[%s332] ss:$9 sm:$0xff] %v322
        %s334 = scalar_lea.vmem [#allocation1], 4
        %335 = vst [vmem:[%s334] ss:$9 sm:$0xff] %v323
        %s336 = scalar_lea.vmem [#allocation1], 5
        %337 = vst [vmem:[%s336] ss:$9 sm:$0xff] %v324
        %s338 = scalar_lea.vmem [#allocation1], 6
        %339 = vst [vmem:[%s338] ss:$9 sm:$0xff] %v325
        %s340 = scalar_lea.vmem [#allocation1], 7
        %341 = vst [vmem:[%s340] ss:$9 sm:$0xff] %v326
        %v342 = vld [vmem:[#allocation1] sm:$0xff]
        %343 = vset.pattern.permute.xlu0 0
        %344 = vperm.xlu0 %343, %v342
        %v345 = vpop.permute.xlu0 %344
        %v346 = vlaneseq
        %v347 = vand.u32 %v346, 127
        %v348 = vperm.slane %v345, %v347
        %v350 = vadd.f32 %v317, %v348
        %vm351 = vcmask 57344
        %352 = vst.msk [vmem:[#allocation4] sm:$0x1] %vm351, %v350
        %v353 = vld [vmem:[#allocation5] sm:$0x1]
        %v354 = vmul.f32 %v305, %v305
        %356 = vrot.lane.b32.xlu0 %v354, 64
        %v357 = vpop.permute.xlu0 %356
        %v359 = vsel %vm272, %v357, 0.0
        %360 = vadd.xlane.f32.xlu0 %v359
        %v361 = vpop.xlane.xlu0 %360
        %v362 = vadd.f32 %v361, 0.0
        %v364 = vperm.slane %v362, 0
        %v365 = vperm.slane %v362, 1
        %v366 = vperm.slane %v362, 2
        %v367 = vperm.slane %v362, 3
        %v368 = vperm.slane %v362, 4
        %v369 = vperm.slane %v362, 5
        %v370 = vperm.slane %v362, 6
        %v371 = vperm.slane %v362, 7
        %372 = vst [vmem:[#allocation1] ss:$9 sm:$0xff] %v364
        %s373 = scalar_lea.vmem [#allocation1], 1
        %374 = vst [vmem:[%s373] ss:$9 sm:$0xff] %v365
        %s375 = scalar_lea.vmem [#allocation1], 2
        %376 = vst [vmem:[%s375] ss:$9 sm:$0xff] %v366
        %s377 = scalar_lea.vmem [#allocation1], 3
        %378 = vst [vmem:[%s377] ss:$9 sm:$0xff] %v367
        %s379 = scalar_lea.vmem [#allocation1], 4
        %380 = vst [vmem:[%s379] ss:$9 sm:$0xff] %v368
        %s381 = scalar_lea.vmem [#allocation1], 5
        %382 = vst [vmem:[%s381] ss:$9 sm:$0xff] %v369
        %s383 = scalar_lea.vmem [#allocation1], 6
        %384 = vst [vmem:[%s383] ss:$9 sm:$0xff] %v370
        %s385 = scalar_lea.vmem [#allocation1], 7
        %386 = vst [vmem:[%s385] ss:$9 sm:$0xff] %v371
        %v387 = vld [vmem:[#allocation1] sm:$0xff]
        %388 = vset.pattern.permute.xlu0 0
        %389 = vperm.xlu0 %388, %v387
        %v390 = vpop.permute.xlu0 %389
        %v391 = vperm.slane %v390, %v347
        %v393 = vadd.f32 %v353, %v391
        %394 = vst.msk [vmem:[#allocation5] sm:$0x1] %vm351, %v393
        %v395 = vld [vmem:[#allocation6] sm:$0xff]
        %v396 = vsel %vm272, %v308, 0
        %398 = vmatpush.xpose.msra.mxu0 0.0
        %399 = vmatpush.xpose.msra.mxu0 0.0
        %400 = vmatpush.xpose.msra.mxu0 0.0
        %401 = vmatpush.xpose.msra.mxu0 0.0
        %402 = vmatpush.xpose.msra.mxu0 0.0
        %403 = vmatpush.xpose.msra.mxu0 0.0
        %404 = vmatpush.xpose.msra.mxu0 0.0
        %405 = vmatpush.xpose.msra.mxu0 0.0
        %406 = vmatpush.xpose.msra.mxu0 0.0
        %407 = vmatpush.xpose.msra.mxu0 0.0
        %408 = vmatpush.xpose.msra.mxu0 0.0
        %409 = vmatpush.xpose.msra.mxu0 0.0
        %410 = vmatpush.xpose.msra.mxu0 0.0
        %411 = vmatpush.xpose.msra.mxu0 0.0
        %412 = vmatpush.xpose.msra.mxu0 0.0
        %413 = vmatpush.xpose.msra.mxu0 %v396
        %414 = vmatmul.f32.gmra.mxu0 %v396
        %v415 = vpop.f32.mrf.mxu0
        %v416 = vadd.f32 0.0, %v415
        %417 = vdwg.mxu0
        %v418 = vadd.f32 %v395, %v416
        %vm419 = vcmask 64512
        %420 = vst.msk [vmem:[#allocation6] sm:$0xff] %vm419, %v418
        %p421 = scmp.eq.s32.totalorder %s18, 1
        // Predicated region
        $region41: #{tpu_custom_call.1} parent=31 // pred_check
          %p422 = pneg %p421
        $region42: #{tpu_custom_call.1} parent=31 // pred_check_branch
          %424 = sbr.rel (%p422) target = $region44
        $region43: #{tpu_custom_call.1} parent=31 // pred_region
          %s425 = sld [smem:[#allocation2]]
          %s426 = sld [smem:[#allocation2 + $0x1]]
          %s427 = smul.f32 %s426, 160.0
          %v428 = vstv %s427
          %v429 = vrcp.pop %v428
          %v430 = vmul.f32 %v428, %v429
          %v431 = vsub.f32 1.0, %v430
          %v432 = vmul.f32 %v429, %v431
          %v433 = vadd.f32 %v429, %v432
          %vm434 = vweird.f32 %v428
          %vm435 = vweird.f32 %v429
          %vm436 = vmor %vm434, %vm435
          %v437 = vsel %vm436, %v429, %v433
          %v438 = vand.u32 2147483647, %v428
          %vm439 = vcmp.eq.f32.partialorder %v438, 8.507059e+37
          %v440 = vand.u32 %v428, 2147483648
          %v441 = vor.u32 1.1754944e-38, %v440
          %v442 = vsel %vm439, %v441, %v437
          %s443 = vtos %v442
          %s444 = smul.f32 %s425, %s443
          %v445 = vld [vmem:[#allocation3] sm:$0xff]
          %v446 = vld [vmem:[#allocation4] sm:$0x1]
          %448 = vset.pattern.permute.xlu0 0
          %449 = vperm.xlu0 %448, %v445
          %v450 = vpop.permute.xlu0 %449
          %v453 = vperm.slane %v446, 0
          %v455 = vmul.f32 %v450, %v453
          %v456 = vld [vmem:[#allocation6] sm:$0xff]
          %v457 = vrcp.pop 64.0
          %v458 = vmul.f32 64.0, %v457
          %v459 = vsub.f32 1.0, %v458
          %v460 = vmul.f32 %v457, %v459
          %v461 = vadd.f32 %v457, %v460
          %vm462 = vweird.f32 %v457
          %v463 = vsel %vm462, %v457, %v461
          %v464 = vmul.f32 %v455, %v463
          %v465 = vsub.f32 %v456, %v464
          %v466 = vrcp.pop 63.0
          %v467 = vmul.f32 63.0, %v466
          %v468 = vsub.f32 1.0, %v467
          %v469 = vmul.f32 %v466, %v468
          %v470 = vadd.f32 %v466, %v469
          %vm471 = vweird.f32 %v466
          %v472 = vsel %vm471, %v466, %v470
          %v473 = vmul.f32 %v465, %v472
          %v474 = vld [vmem:[#allocation5] sm:$0x1]
          %v475 = vmul.f32 %v446, %v446
          %v476 = vmul.f32 %v475, %v463
          %v477 = vsub.f32 %v474, %v476
          %v478 = vmul.f32 %v477, %v472
          %v479 = vmul.f32 %v473, %v473
          %v480 = vsel %vm419, %v479, 0.0
          %481 = vadd.xlane.f32.xlu0 %v480
          %v482 = vpop.xlane.xlu0 %481
          %v483 = vrot.slane %v482, 4
          %v484 = vadd.f32 %v482, %v483
          %v485 = vrot.slane %v484, 2
          %v486 = vadd.f32 %v484, %v485
          %v487 = vrot.slane %v486, 1
          %v488 = vadd.f32 %v486, %v487
          %s489 = vtos %v488
          %v490 = vmul.f32 %v478, %v478
          %v491 = vsel %vm351, %v490, 0.0
          %492 = vadd.xlane.f32.xlu0 %v491
          %v493 = vpop.xlane.xlu0 %492
          %v494 = vrot.slane %v493, 4
          %v495 = vadd.f32 %v493, %v494
          %v496 = vrot.slane %v495, 2
          %v497 = vadd.f32 %v495, %v496
          %v498 = vrot.slane %v497, 1
          %v499 = vadd.f32 %v497, %v498
          %s500 = vtos %v499
          %s501 = ssub.f32 %s489, %s500
          %v502 = vrcp.pop 64.0
          %v503 = vmul.f32 64.0, %v502
          %v504 = vsub.f32 1.0, %v503
          %v505 = vmul.f32 %v502, %v504
          %v506 = vadd.f32 %v502, %v505
          %vm507 = vweird.f32 %v502
          %v508 = vsel %vm507, %v502, %v506
          %s509 = vtos %v508
          %s510 = smul.f32 %s501, %s509
          %s511 = smul.f32 %s510, 0.1
          %s512 = sadd.f32 %s444, %s511
          %s513 = scalar_lea.smem [#allocation10], 0
          %514 = sst [smem:[%s513]] %s512
        $region44: #{tpu_custom_call.1} parent=31 // pred_fallthru
          _
        // Predicated region
        $region45: #{tpu_custom_call.1} parent=31 // pred_check
          %p515 = pneg %p109
        $region46: #{tpu_custom_call.1} parent=31 // pred_check_branch
          %517 = sbr.rel (%p515) target = $region48
        $region47: #{tpu_custom_call.1} parent=31 // pred_region
          %519 = vsyncadd [#allocation9], 0
          %s521 = sshll.u32 %s3, 4
          %s522 = int_to_ptr.hbm [resolvable:$true] %s521
          %524 = dma.smem_to_hbm [#allocation10], 16, %s522, [#allocation9]
        $region48: #{tpu_custom_call.1} parent=31 // pred_fallthru
          _
        // Predicated region
        $region49: #{tpu_custom_call.1} parent=31 // pred_check
          %p525 = pneg %p109
        $region50: #{tpu_custom_call.1} parent=31 // pred_check_branch
          %527 = sbr.rel (%p525) target = $region52
        $region51: #{tpu_custom_call.1} parent=31 // pred_region
          %529 = dma.done [#allocation9], 16
        $region52: #{tpu_custom_call.1} parent=31 // pred_fallthru
          _
        %530 = sfence
      $region32: #{tpu_custom_call.1} parent=5 // pred_fallthru
        _
      %p531 = scmp.le.s32.totalorder 2, %s13
      // Predicated region
      $region53: #{tpu_custom_call.1} parent=5 // pred_check
        %p532 = pneg %p531
      $region54: #{tpu_custom_call.1} parent=5 // pred_check_branch
        %534 = sbr.rel (%p532) target = $region56
      $region55: #{tpu_custom_call.1} parent=5 // pred_region
        %s535 = ssub.s32 %s13, 2
      $region56: #{tpu_custom_call.1} parent=5 // pred_fallthru
        _
    $region6: #{tpu_custom_call.1} parent=1 // loop_footer
      %s17 = sadd.s32 1, %s13
    $region7: #{tpu_custom_call.1} parent=1 // loop_footer_branch
      %12 = sbr.rel target = $region3
    $region8: #{tpu_custom_call.1} parent=1 // loop_exit
      _
    %536 = vsyncpa [#allocation8], 1
    %s537 = scalar_lea.sflag [#allocation8], 1
    %538 = vsyncpa %s537, 1
    %539 = vsyncpa [#allocation9], 1
    %s540 = scalar_lea.sflag [#allocation9], 1
    %541 = vsyncpa %s540, 1

</llo_original>
